<compile_context>
chip_gen: v7x
topology: tpu7x:2x2x1
jax: 0.10.0
libtpu: 0.0.40
codegen_flags: <defaults>
</compile_context>

<pallas_src>
import functools

import jax
import jax.numpy as jnp
import numpy as np
from jax.experimental import pallas as pl
from jax.experimental.pallas import tpu as pltpu

BN_EPS = 1e-5
_VMEM_LIMIT = 48 * 1024 * 1024        # scoped-VMEM request; safe on v5e/v6e/v7x
_TILE_VMEM_BUDGET = 24 * 1024 * 1024  # target for double-buffered per-tile bytes


def _stats_kernel(p_ref, w_ref, sum_ref, sq_ref):
    """Per-tile BN statistics: (8, cout_p) partial sum / sumsq of y = P @ W.

    The (block_m, cout_p) f32 matmul result is reduced with VPU-only vreg adds
    (sublane-group reshape), leaving the final 8->1 + cross-tile reduce to XLA.
    """
    y = jnp.dot(p_ref[...], w_ref[...], preferred_element_type=jnp.float32)
    bm, cp = y.shape
    yg = y.reshape(bm // 8, 8, cp)
    sum_ref[0] = jnp.sum(yg, axis=0)
    sq_ref[0] = jnp.sum(yg * yg, axis=0)


def _matmul_bn_relu_kernel(p_ref, w_ref, scale_ref, shift_ref, o_ref):
    """Recompute y = P @ W (bf16 x bf16 -> f32), then fused y*scale+shift -> ReLU."""
    y = jnp.dot(p_ref[...], w_ref[...], preferred_element_type=jnp.float32)
    o_ref[...] = jnp.maximum(y * scale_ref[...] + shift_ref[...], 0.0)


def _im2col_nhwc(x_nhwc, kernel_size, stride, pad):
    """(N,H,W,C) -> (N*Ho*Wo, kh*kw*C); K ordered (kh, kw, Cin). Runs in x's dtype."""
    n, h, w, c = x_nhwc.shape
    h_out = (h + 2 * pad - kernel_size) // stride + 1
    w_out = (w + 2 * pad - kernel_size) // stride + 1
    xp = jnp.pad(x_nhwc, ((0, 0), (pad, pad), (pad, pad), (0, 0)))
    cols = []
    for kh in range(kernel_size):
        for kw in range(kernel_size):
            cols.append(xp[:, kh:kh + (h_out - 1) * stride + 1:stride,
                           kw:kw + (w_out - 1) * stride + 1:stride, :])
    patches = jnp.concatenate(cols, axis=-1)            # (N, Ho, Wo, k*k*C)
    return (patches.reshape(n * h_out * w_out, kernel_size * kernel_size * c),
            h_out, w_out)


def _pick_block_m(k, cout_p, m):
    """Biggest M tile whose double-buffered bf16-patches + f32-out fits the budget."""
    per_row = 2 * (k * 2 + cout_p * 4)      # 2x buffers: patches(bf16) + out(f32)
    bm = _TILE_VMEM_BUDGET // per_row
    bm = min(1024, bm)                      # per-step overhead is negligible past 1024
    bm = min(bm, pl.cdiv(m, 8) * 8)         # don't pad far beyond the real row count
    return max(8, (bm // 8) * 8)


@functools.partial(jax.jit, static_argnames=("kernel_size", "stride", "block_m"))
def conv_block_forward(x_nchw, weight, bias, gamma, beta, *,
                       kernel_size, stride, block_m=None):
    """ConvBlock forward (transpose=False, normalization='batch', activation='relu').

    x_nchw : (N, Cin, H, W) f32    weight : (Cout, Cin, kh, kw) f32 (PyTorch layout)
    bias   : (Cout,)  -- unused: it cancels exactly under training-mode BatchNorm.
    gamma, beta : (Cout,)          returns (N, Cout, Ho, Wo) f32
    """
    # Only valid because BN (batch statistics) subtracts the per-channel mean,
    # which absorbs any constant per-channel conv bias exactly.
    del bias
    n, cin, h, w = x_nchw.shape
    cout = weight.shape[0]
    pad = (kernel_size - 1) // 2

    # Cast to bf16 BEFORE im2col so the 9x-expanded patches are built in bf16.
    x_nhwc = x_nchw.transpose(0, 2, 3, 1).astype(jnp.bfloat16)
    patches, h_out, w_out = _im2col_nhwc(x_nhwc, kernel_size, stride, pad)
    m = n * h_out * w_out
    k = cin * kernel_size * kernel_size

    cout_p = ((cout + 127) // 128) * 128               # lane-dense padded channels
    if block_m is None:
        block_m = _pick_block_m(k, cout_p, m)
    assert block_m % 8 == 0
    m_p = pl.cdiv(m, block_m) * block_m
    grid_m = m_p // block_m

    # Zero row padding is exact for the statistics: 0 @ W contributes nothing.
    patches = jnp.pad(patches, ((0, m_p - m), (0, 0)))                 # bf16
    w_mat = weight.astype(jnp.float32).transpose(2, 3, 1, 0).reshape(k, cout)
    w_mat = jnp.pad(w_mat, ((0, 0), (0, cout_p - cout))).astype(jnp.bfloat16)
    gamma_p = jnp.pad(gamma.astype(jnp.float32), (0, cout_p - cout))
    beta_p = jnp.pad(beta.astype(jnp.float32), (0, cout_p - cout))

    # ---- Pass 1 (parallel over M): per-tile BN partial statistics, no y write.
    sum_p, sq_p = pl.pallas_call(
        _stats_kernel,
        out_shape=(jax.ShapeDtypeStruct((grid_m, 8, cout_p), jnp.float32),
                   jax.ShapeDtypeStruct((grid_m, 8, cout_p), jnp.float32)),
        grid=(grid_m,),
        in_specs=[pl.BlockSpec((block_m, k), lambda i: (i, 0)),
                  pl.BlockSpec((k, cout_p), lambda i: (0, 0))],
        out_specs=(pl.BlockSpec((1, 8, cout_p), lambda i: (i, 0, 0)),
                   pl.BlockSpec((1, 8, cout_p), lambda i: (i, 0, 0))),
        compiler_params=pltpu.CompilerParams(
            dimension_semantics=("parallel",),          # megacore-shardable on v7x
            vmem_limit_bytes=_VMEM_LIMIT),
        cost_estimate=pl.CostEstimate(
            flops=2 * m_p * k * cout_p + 3 * m_p * cout_p,
            transcendentals=0,
            bytes_accessed=(m_p * k * 2 + k * cout_p * 2
                            + 2 * grid_m * 8 * cout_p * 4)),
    )(patches, w_mat)

    # ---- Tiny per-channel BN math in plain XLA (pairwise reduce of partials).
    ch_sum = jnp.sum(sum_p, axis=(0, 1))
    ch_sq = jnp.sum(sq_p, axis=(0, 1))
    inv_m = 1.0 / jnp.float32(m)                        # true (unpadded) row count
    mean = ch_sum * inv_m
    var = jnp.maximum(ch_sq * inv_m - mean * mean, 0.0)  # biased variance
    scale = gamma_p * jax.lax.rsqrt(var + BN_EPS)
    shift = beta_p - mean * scale

    # ---- Pass 2 (parallel over M): recompute matmul, fused BN + ReLU, single write.
    out_flat = pl.pallas_call(
        _matmul_bn_relu_kernel,
        out_shape=jax.ShapeDtypeStruct((m_p, cout_p), jnp.float32),
        grid=(grid_m,),
        in_specs=[pl.BlockSpec((block_m, k), lambda i: (i, 0)),
                  pl.BlockSpec((k, cout_p), lambda i: (0, 0)),
                  pl.BlockSpec((1, cout_p), lambda i: (0, 0)),
                  pl.BlockSpec((1, cout_p), lambda i: (0, 0))],
        out_specs=pl.BlockSpec((block_m, cout_p), lambda i: (i, 0)),
        compiler_params=pltpu.CompilerParams(
            dimension_semantics=("parallel",),
            vmem_limit_bytes=_VMEM_LIMIT),
        cost_estimate=pl.CostEstimate(
            flops=2 * m_p * k * cout_p + 3 * m_p * cout_p,
            transcendentals=0,
            bytes_accessed=(m_p * k * 2 + k * cout_p * 2
                            + m_p * cout_p * 4 + 2 * cout_p * 4)),
    )(patches, w_mat, scale.reshape(1, cout_p), shift.reshape(1, cout_p))

    # (M, Cout_p) -> (N, Cout, Ho, Wo)  (module returns NCHW like PyTorch).
    out = out_flat[:m, :cout].reshape(n, h_out, w_out, cout)
    return out.transpose(0, 3, 1, 2)


def _reference(x_nchw, weight, bias, gamma, beta, kernel_size, stride):
    """Reference with the same bf16-operand / f32-accumulate conv policy as the
    kernel, so the comparison isolates kernel correctness."""
    pad = (kernel_size - 1) // 2
    y = jax.lax.conv_general_dilated(
        x_nchw.astype(jnp.bfloat16), weight.astype(jnp.bfloat16),
        window_strides=(stride, stride), padding=[(pad, pad), (pad, pad)],
        dimension_numbers=("NCHW", "OIHW", "NCHW"),
        preferred_element_type=jnp.float32)
    y = y + bias[None, :, None, None]
    mean = y.mean(axis=(0, 2, 3), keepdims=True)
    var = ((y - mean) ** 2).mean(axis=(0, 2, 3), keepdims=True)
    y = (y - mean) * jax.lax.rsqrt(var + BN_EPS)
    y = y * gamma[None, :, None, None] + beta[None, :, None, None]
    return jnp.maximum(y, 0.0)


if __name__ == "__main__":
    # ConvBlock(in_features=4, out_features=8, kernel_size=3, stride=1,
    #           transpose=False, normalization='batch', activation='relu')
    N, CIN, H, W = 2, 4, 16, 16
    COUT, KSIZE, STRIDE = 8, 3, 1

    key = jax.random.PRNGKey(0)
    kx, kw, kb, kg, kbt = jax.random.split(key, 5)

    x = jax.random.normal(kx, (N, CIN, H, W), dtype=jnp.float32)
    fan_in = CIN * KSIZE * KSIZE
    bound = 1.0 / np.sqrt(fan_in)
    weight = jax.random.uniform(kw, (COUT, CIN, KSIZE, KSIZE),
                                minval=-bound, maxval=bound, dtype=jnp.float32)
    bias = jax.random.uniform(kb, (COUT,), minval=-bound, maxval=bound,
                              dtype=jnp.float32)
    gamma = jax.random.uniform(kg, (COUT,), minval=0.5, maxval=1.5,
                               dtype=jnp.float32)
    beta = 0.1 * jax.random.normal(kbt, (COUT,), dtype=jnp.float32)

    # block_m=128 -> 4-step M grid here, exercising the tiled/pipelined path and
    # the per-tile partial-statistics reduction. (Auto-sizing picks 512-1024 for
    # large shapes.)
    y = conv_block_forward(x, weight, bias, gamma, beta,
                           kernel_size=KSIZE, stride=STRIDE, block_m=128)
    jax.block_until_ready(y)

    y_ref = _reference(x, weight, bias, gamma, beta, KSIZE, STRIDE)
    np.testing.assert_allclose(np.asarray(y), np.asarray(y_ref),
                               rtol=2e-3, atol=2e-3)
    print("KERNEL_OK")
</pallas_src>

<mosaic_0001>
module attributes {stable_mosaic.version = 11 : i64} {
  func.func @_stats_kernel(%arg0: i32, %arg1: memref<128x36xbf16, #tpu.memory_space<vmem>>, %arg2: memref<36x128xbf16, #tpu.memory_space<vmem>>, %arg3: memref<1x8x128xf32, #tpu.memory_space<vmem>>, %arg4: memref<1x8x128xf32, #tpu.memory_space<vmem>>) attributes {dimension_semantics = [#tpu.dimension_semantics<parallel>], iteration_bounds = array<i64: 4>, scalar_prefetch = 0 : i64, scratch_operands = 0 : i64, tpu.core_type = #tpu.core_type<tc>, window_params = [{transform_indices = @transform_0, window_bounds = array<i64: 128, 36>}, {pipeline_mode = #tpu.pipeline_mode<synchronous>, transform_indices = @transform_1, window_bounds = array<i64: 36, 128>}, {transform_indices = @transform_2, window_bounds = array<i64: 1, 8, 128>}, {transform_indices = @transform_3, window_bounds = array<i64: 1, 8, 128>}]} {
    %c0 = arith.constant 0 : index
    %c0_0 = arith.constant 0 : index
    %0 = vector.load %arg1[%c0, %c0_0] : memref<128x36xbf16, #tpu.memory_space<vmem>>, vector<128x36xbf16>
    %c0_1 = arith.constant 0 : index
    %c0_2 = arith.constant 0 : index
    %1 = vector.load %arg2[%c0_1, %c0_2] : memref<36x128xbf16, #tpu.memory_space<vmem>>, vector<36x128xbf16>
    %cst = arith.constant dense<0.000000e+00> : vector<128x128xf32>
    %2 = tpu.matmul %0, %1, %cst {dimension_numbers = #tpu.dot_dimension_numbers<[1], [0], [0], [1], [0, 0, 1, 1], [], []>} : vector<128x36xbf16>, vector<36x128xbf16>, vector<128x128xf32> -> vector<128x128xf32>
    %3 = vector.shape_cast %2 : vector<128x128xf32> to vector<16x8x128xf32>
    %cst_3 = arith.constant dense<0.000000e+00> : vector<8x128xf32>
    %4 = vector.multi_reduction <add>, %3, %cst_3 [0] : vector<16x8x128xf32> to vector<8x128xf32>
    %c0_4 = arith.constant 0 : index
    %c0_5 = arith.constant 0 : index
    %c0_6 = arith.constant 0 : index
    %5 = vector.load %arg3[%c0_4, %c0_5, %c0_6] : memref<1x8x128xf32, #tpu.memory_space<vmem>>, vector<1x8x128xf32>
    %6 = vector.shape_cast %5 : vector<1x8x128xf32> to vector<8x128xf32>
    %7 = vector.shape_cast %4 : vector<8x128xf32> to vector<1x8x128xf32>
    tpu.vector_store %arg3[%c0_4, %c0_5, %c0_6], %7 {strides = array<i32>} : memref<1x8x128xf32, #tpu.memory_space<vmem>>, vector<1x8x128xf32>,
    %8 = arith.mulf %3, %3 : vector<16x8x128xf32>
    %cst_7 = arith.constant dense<0.000000e+00> : vector<8x128xf32>
    %9 = vector.multi_reduction <add>, %8, %cst_7 [0] : vector<16x8x128xf32> to vector<8x128xf32>
    %c0_8 = arith.constant 0 : index
    %c0_9 = arith.constant 0 : index
    %c0_10 = arith.constant 0 : index
    %10 = vector.load %arg4[%c0_8, %c0_9, %c0_10] : memref<1x8x128xf32, #tpu.memory_space<vmem>>, vector<1x8x128xf32>
    %11 = vector.shape_cast %10 : vector<1x8x128xf32> to vector<8x128xf32>
    %12 = vector.shape_cast %9 : vector<8x128xf32> to vector<1x8x128xf32>
    tpu.vector_store %arg4[%c0_8, %c0_9, %c0_10], %12 {strides = array<i32>} : memref<1x8x128xf32, #tpu.memory_space<vmem>>, vector<1x8x128xf32>,
    return
  }
  func.func @transform_0(%arg0: i32) -> (i32, i32) {
    %c0_i32 = arith.constant 0 : i32
    %c0_i32_0 = arith.constant 0 : i32
    return %arg0, %c0_i32 : i32, i32
  }
  func.func @transform_1(%arg0: i32) -> (i32, i32) {
    %c0_i32 = arith.constant 0 : i32
    %c0_i32_0 = arith.constant 0 : i32
    %c0_i32_1 = arith.constant 0 : i32
    return %c0_i32, %c0_i32_0 : i32, i32
  }
  func.func @transform_2(%arg0: i32) -> (i32, i32, i32) {
    %c0_i32 = arith.constant 0 : i32
    %c0_i32_0 = arith.constant 0 : i32
    %c0_i32_1 = arith.constant 0 : i32
    return %arg0, %c0_i32, %c0_i32_0 : i32, i32, i32
  }
  func.func @transform_3(%arg0: i32) -> (i32, i32, i32) {
    %c0_i32 = arith.constant 0 : i32
    %c0_i32_0 = arith.constant 0 : i32
    %c0_i32_1 = arith.constant 0 : i32
    return %arg0, %c0_i32, %c0_i32_0 : i32, i32, i32
  }
}

module attributes {stable_mosaic.version = 11 : i64} {
  func.func @_matmul_bn_relu_kernel(%arg0: i32, %arg1: memref<128x36xbf16, #tpu.memory_space<vmem>>, %arg2: memref<36x128xbf16, #tpu.memory_space<vmem>>, %arg3: memref<1x128xf32, #tpu.memory_space<vmem>>, %arg4: memref<1x128xf32, #tpu.memory_space<vmem>>, %arg5: memref<128x128xf32, #tpu.memory_space<vmem>>) attributes {dimension_semantics = [#tpu.dimension_semantics<parallel>], iteration_bounds = array<i64: 4>, scalar_prefetch = 0 : i64, scratch_operands = 0 : i64, tpu.core_type = #tpu.core_type<tc>, window_params = [{transform_indices = @transform_0, window_bounds = array<i64: 128, 36>}, {pipeline_mode = #tpu.pipeline_mode<synchronous>, transform_indices = @transform_1, window_bounds = array<i64: 36, 128>}, {pipeline_mode = #tpu.pipeline_mode<synchronous>, transform_indices = @transform_2, window_bounds = array<i64: 1, 128>}, {pipeline_mode = #tpu.pipeline_mode<synchronous>, transform_indices = @transform_3, window_bounds = array<i64: 1, 128>}, {transform_indices = @transform_4, window_bounds = array<i64: 128, 128>}]} {
    %c0 = arith.constant 0 : index
    %c0_0 = arith.constant 0 : index
    %0 = vector.load %arg1[%c0, %c0_0] : memref<128x36xbf16, #tpu.memory_space<vmem>>, vector<128x36xbf16>
    %c0_1 = arith.constant 0 : index
    %c0_2 = arith.constant 0 : index
    %1 = vector.load %arg2[%c0_1, %c0_2] : memref<36x128xbf16, #tpu.memory_space<vmem>>, vector<36x128xbf16>
    %cst = arith.constant dense<0.000000e+00> : vector<128x128xf32>
    %2 = tpu.matmul %0, %1, %cst {dimension_numbers = #tpu.dot_dimension_numbers<[1], [0], [0], [1], [0, 0, 1, 1], [], []>} : vector<128x36xbf16>, vector<36x128xbf16>, vector<128x128xf32> -> vector<128x128xf32>
    %c0_3 = arith.constant 0 : index
    %c0_4 = arith.constant 0 : index
    %3 = vector.load %arg3[%c0_3, %c0_4] : memref<1x128xf32, #tpu.memory_space<vmem>>, vector<1x128xf32>
    %4 = vector.broadcast %3 : vector<1x128xf32> to vector<128x128xf32>
    %5 = arith.mulf %2, %4 : vector<128x128xf32>
    %c0_5 = arith.constant 0 : index
    %c0_6 = arith.constant 0 : index
    %6 = vector.load %arg4[%c0_5, %c0_6] : memref<1x128xf32, #tpu.memory_space<vmem>>, vector<1x128xf32>
    %7 = vector.broadcast %6 : vector<1x128xf32> to vector<128x128xf32>
    %8 = arith.addf %5, %7 : vector<128x128xf32>
    %cst_7 = arith.constant 0.000000e+00 : f32
    %9 = vector.broadcast %cst_7 : f32 to vector<128x128xf32>
    %10 = arith.maximumf %8, %9 : vector<128x128xf32>
    %c0_8 = arith.constant 0 : index
    %c0_9 = arith.constant 0 : index
    %11 = vector.load %arg5[%c0_8, %c0_9] : memref<128x128xf32, #tpu.memory_space<vmem>>, vector<128x128xf32>
    tpu.vector_store %arg5[%c0_8, %c0_9], %10 {strides = array<i32>} : memref<128x128xf32, #tpu.memory_space<vmem>>, vector<128x128xf32>,
    return
  }
  func.func @transform_0(%arg0: i32) -> (i32, i32) {
    %c0_i32 = arith.constant 0 : i32
    %c0_i32_0 = arith.constant 0 : i32
    return %arg0, %c0_i32 : i32, i32
  }
  func.func @transform_1(%arg0: i32) -> (i32, i32) {
    %c0_i32 = arith.constant 0 : i32
    %c0_i32_0 = arith.constant 0 : i32
    %c0_i32_1 = arith.constant 0 : i32
    return %c0_i32, %c0_i32_0 : i32, i32
  }
  func.func @transform_2(%arg0: i32) -> (i32, i32) {
    %c0_i32 = arith.constant 0 : i32
    %c0_i32_0 = arith.constant 0 : i32
    %c0_i32_1 = arith.constant 0 : i32
    return %c0_i32, %c0_i32_0 : i32, i32
  }
  func.func @transform_3(%arg0: i32) -> (i32, i32) {
    %c0_i32 = arith.constant 0 : i32
    %c0_i32_0 = arith.constant 0 : i32
    %c0_i32_1 = arith.constant 0 : i32
    return %c0_i32, %c0_i32_0 : i32, i32
  }
  func.func @transform_4(%arg0: i32) -> (i32, i32) {
    %c0_i32 = arith.constant 0 : i32
    %c0_i32_0 = arith.constant 0 : i32
    return %arg0, %c0_i32 : i32, i32
  }
}

</mosaic_0001>

<llo_original>
// kernel: conv_block_forward.3
$region0: #{conv_block_forward.3}
  #allocation0 [shape = 'u32[]', space=smem, size = 0x4, offset = 0x4, fixed_abs, tag = 'smem constant byte address 0x4 - core index']
  #allocation1 [shape = 'u32[144,128]{1,0:T(1,128)}', space=vmem, size = 0x12000, scoped, tag = 'internal scratch']
  %s0 = inlined_call_operand.vmem [shape: bf16[512,36], index: 0, kind: input, shape index: {}]
  %s1 = inlined_call_operand.vmem [shape: bf16[36,128], index: 1, kind: input, shape index: {}]
  %s2 = inlined_call_operand.vmem [shape: f32[1,128], index: 2, kind: input, shape index: {}]
  %s3 = inlined_call_operand.vmem [shape: f32[1,128], index: 3, kind: input, shape index: {}]
  %s4 = inlined_call_operand.vmem [shape: f32[512,128], index: 4, kind: output, shape index: {}]
  %s5 = sld [smem:[#allocation0]]
  $region49: #{conv_block_forward.3} parent=0
    _
  %s7 = ssub.s32 1, %s5
  %s8 = scalar_select 0, %s7, %s5
  loop: start=0, step=1, limit=6
  $region2: #{conv_block_forward.3} parent=0 // loop_pre_header
    _
  $region3: #{conv_block_forward.3} parent=0 // loop_header
    %s10 = sphi 0, %s14
    %p11 = scmp.ge.s32.totalorder %s10, 6
    %s20 = sphi 0, %s22
    %s23 = sphi 0, %s20
    %s24 = sphi 0, %s23
    %s40 = sphi 0, %s24
    %s44 = sphi 0, %s44
    %s46 = sphi 0, %s44
    %s47 = sphi 0, %s46
    %s61 = sphi 0, %s47
    %s65 = sphi 0, %s65
    %s67 = sphi 0, %s65
    %s68 = sphi 0, %s67
    %s82 = sphi 0, %s68
    %s86 = sphi 0, %s86
    %s88 = sphi 0, %s86
    %s89 = sphi 0, %s88
    %s103 = sphi 0, %s89
    %s109 = sphi 0, %s111
    %s112 = sphi 0, %s109
    %s113 = sphi 0, %s112
    %s129 = sphi 0, %s113
  $region4: #{conv_block_forward.3} parent=0 // loop_header_branch
    %13 = sbr.rel (%p11) target = $region8
  $region5: #{conv_block_forward.3} parent=0 // loop_body
    %s15 = ssub.s32 %s10, 1
    %s16 = ssub.s32 %s10, 2
    %s17 = sadd.s32 %s10, 1
    %s18 = ssub.s32 %s10, %s17
    %p19 = scmp.eq.s32.totalorder %s18, 0
    %s21 = sadd.s32 %s20, 1
    %s22 = scalar_select %p19, %s20, %s21
    %p25 = pneg %p19
    %p26 = scmp.eq.s32.totalorder %s10, 3
    %p27 = por %p25, %p26
    %p28 = scmp.ne.s32.totalorder %s20, %s23
    %p29 = scmp.eq.s32.totalorder %s10, 0
    %p30 = por %p28, %p29
    %p31 = scmp.ne.s32.totalorder %s20, %s23
    %p32 = scmp.eq.s32.totalorder %s15, 3
    %p33 = por %p31, %p32
    %p34 = scmp.ne.s32.totalorder %s23, %s24
    %p35 = scmp.eq.s32.totalorder %s15, 0
    %p36 = por %p34, %p35
    %p37 = scmp.ne.s32.totalorder %s23, %s24
    %p38 = scmp.eq.s32.totalorder %s16, 3
    %p39 = por %p37, %p38
    %p41 = scmp.ne.s32.totalorder %s24, %s40
    %p42 = scmp.eq.s32.totalorder %s16, 0
    %p43 = por %p41, %p42
    %s45 = sadd.s32 %s44, 1
    %p48 = scmp.eq.s32.totalorder %s10, 3
    %p49 = scmp.ne.s32.totalorder %s44, %s46
    %p50 = scmp.eq.s32.totalorder %s10, 0
    %p51 = por %p49, %p50
    %p52 = scmp.ne.s32.totalorder %s44, %s46
    %p53 = scmp.eq.s32.totalorder %s15, 3
    %p54 = por %p52, %p53
    %p55 = scmp.ne.s32.totalorder %s46, %s47
    %p56 = scmp.eq.s32.totalorder %s15, 0
    %p57 = por %p55, %p56
    %p58 = scmp.ne.s32.totalorder %s46, %s47
    %p59 = scmp.eq.s32.totalorder %s16, 3
    %p60 = por %p58, %p59
    %p62 = scmp.ne.s32.totalorder %s47, %s61
    %p63 = scmp.eq.s32.totalorder %s16, 0
    %p64 = por %p62, %p63
    %s66 = sadd.s32 %s65, 1
    %p69 = scmp.eq.s32.totalorder %s10, 3
    %p70 = scmp.ne.s32.totalorder %s65, %s67
    %p71 = scmp.eq.s32.totalorder %s10, 0
    %p72 = por %p70, %p71
    %p73 = scmp.ne.s32.totalorder %s65, %s67
    %p74 = scmp.eq.s32.totalorder %s15, 3
    %p75 = por %p73, %p74
    %p76 = scmp.ne.s32.totalorder %s67, %s68
    %p77 = scmp.eq.s32.totalorder %s15, 0
    %p78 = por %p76, %p77
    %p79 = scmp.ne.s32.totalorder %s67, %s68
    %p80 = scmp.eq.s32.totalorder %s16, 3
    %p81 = por %p79, %p80
    %p83 = scmp.ne.s32.totalorder %s68, %s82
    %p84 = scmp.eq.s32.totalorder %s16, 0
    %p85 = por %p83, %p84
    %s87 = sadd.s32 %s86, 1
    %p90 = scmp.eq.s32.totalorder %s10, 3
    %p91 = scmp.ne.s32.totalorder %s86, %s88
    %p92 = scmp.eq.s32.totalorder %s10, 0
    %p93 = por %p91, %p92
    %p94 = scmp.ne.s32.totalorder %s86, %s88
    %p95 = scmp.eq.s32.totalorder %s15, 3
    %p96 = por %p94, %p95
    %p97 = scmp.ne.s32.totalorder %s88, %s89
    %p98 = scmp.eq.s32.totalorder %s15, 0
    %p99 = por %p97, %p98
    %p100 = scmp.ne.s32.totalorder %s88, %s89
    %p101 = scmp.eq.s32.totalorder %s16, 3
    %p102 = por %p100, %p101
    %p104 = scmp.ne.s32.totalorder %s89, %s103
    %p105 = scmp.eq.s32.totalorder %s16, 0
    %p106 = por %p104, %p105
    %s107 = ssub.s32 %s10, %s17
    %p108 = scmp.eq.s32.totalorder %s107, 0
    %s110 = sadd.s32 %s109, 1
    %s111 = scalar_select %p108, %s109, %s110
    %p114 = pneg %p108
    %p115 = scmp.eq.s32.totalorder %s10, 3
    %p116 = por %p114, %p115
    %p117 = scmp.ne.s32.totalorder %s109, %s112
    %p118 = scmp.eq.s32.totalorder %s10, 0
    %p119 = por %p117, %p118
    %p120 = scmp.ne.s32.totalorder %s109, %s112
    %p121 = scmp.eq.s32.totalorder %s15, 3
    %p122 = por %p120, %p121
    %p123 = scmp.ne.s32.totalorder %s112, %s113
    %p124 = scmp.eq.s32.totalorder %s15, 0
    %p125 = por %p123, %p124
    %p126 = scmp.ne.s32.totalorder %s112, %s113
    %p127 = scmp.eq.s32.totalorder %s16, 3
    %p128 = por %p126, %p127
    %p130 = scmp.ne.s32.totalorder %s113, %s129
    %p131 = scmp.eq.s32.totalorder %s16, 0
    %p132 = por %p130, %p131
    %p133 = scmp.le.s32.totalorder 1, %s10
    %p134 = scmp.lt.s32.totalorder %s10, 5
    %p135 = pnand %p133, %p134
    %p136 = pneg %p135
    // Predicated region
    $region9: #{conv_block_forward.3} parent=5 // pred_check
      _
    $region10: #{conv_block_forward.3} parent=5 // pred_check_branch
      %138 = sbr.rel (%p135) target = $region12
    $region11: #{conv_block_forward.3} parent=5 // pred_region
      %s139 = ssub.s32 %s10, 1
      // Predicated region
      $region13: #{conv_block_forward.3} parent=11 // pred_check
        %p140 = pneg %p57
      $region14: #{conv_block_forward.3} parent=11 // pred_check_branch
        %142 = sbr.rel (%p140) target = $region16
      $region15: #{conv_block_forward.3} parent=11 // pred_region
        _
      $region16: #{conv_block_forward.3} parent=11 // pred_fallthru
        _
      // Predicated region
      $region17: #{conv_block_forward.3} parent=11 // pred_check
        %p143 = pneg %p78
      $region18: #{conv_block_forward.3} parent=11 // pred_check_branch
        %145 = sbr.rel (%p143) target = $region20
      $region19: #{conv_block_forward.3} parent=11 // pred_region
        _
      $region20: #{conv_block_forward.3} parent=11 // pred_fallthru
        _
      // Predicated region
      $region21: #{conv_block_forward.3} parent=11 // pred_check
        %p146 = pneg %p99
      $region22: #{conv_block_forward.3} parent=11 // pred_check_branch
        %148 = sbr.rel (%p146) target = $region24
      $region23: #{conv_block_forward.3} parent=11 // pred_region
        _
      $region24: #{conv_block_forward.3} parent=11 // pred_fallthru
        _
    $region12: #{conv_block_forward.3} parent=5 // pred_fallthru
      _
    %p149 = scmp.lt.s32.totalorder %s10, 4
    // Predicated region
    $region25: #{conv_block_forward.3} parent=5 // pred_check
      %p150 = pneg %p149
    $region26: #{conv_block_forward.3} parent=5 // pred_check_branch
      %152 = sbr.rel (%p150) target = $region28
    $region27: #{conv_block_forward.3} parent=5 // pred_region
      // Predicated region
      $region29: #{conv_block_forward.3} parent=27 // pred_check
        %p153 = pneg %p30
      $region30: #{conv_block_forward.3} parent=27 // pred_check_branch
        %155 = sbr.rel (%p153) target = $region32
      $region31: #{conv_block_forward.3} parent=27 // pred_region
        %s156 = smul.u32 16, %s10
        %p157 = scmp.lt.s32.totalorder %s156, 63
        %s158 = scalar_select %p157, %s156, 63
        %s159 = smul.addr %s158, 4
        %s160 = scalar_lea.vmem %s0, %s159
        %s161 = smul.u32 16, %s10
      $region32: #{conv_block_forward.3} parent=27 // pred_fallthru
        _
    $region28: #{conv_block_forward.3} parent=5 // pred_fallthru
      _
    %p162 = scmp.le.s32.totalorder 1, %s10
    %p163 = scmp.lt.s32.totalorder %s10, 5
    %p164 = pnand %p162, %p163
    %p165 = pneg %p164
    // Predicated region
    $region33: #{conv_block_forward.3} parent=5 // pred_check
      _
    $region34: #{conv_block_forward.3} parent=5 // pred_check_branch
      %167 = sbr.rel (%p164) target = $region36
    $region35: #{conv_block_forward.3} parent=5 // pred_region
      %s168 = ssub.s32 %s10, 1
      %s169 = smul.u32 16, %s15
      %p170 = scmp.lt.s32.totalorder %s169, 63
      %s171 = scalar_select %p170, %s169, 63
      %s172 = smul.addr %s171, 4
      %s173 = scalar_lea.vmem %s0, %s172
      %p174 = pneg %p36
      %p175 = pneg %p33
      %p176 = pneg %p57
      %p177 = pneg %p54
      %p178 = pneg %p78
      %p179 = pneg %p75
      %p180 = pneg %p99
      %p181 = pneg %p96
      %p182 = pneg %p125
      %p183 = pneg %p122
      %s184 = smul.u32 16, %s15
      %p185 = scmp.lt.s32.totalorder %s184, 63
      %s186 = scalar_select %p185, %s184, 63
      %s187 = smul.addr %s186, 8
      %s188 = scalar_lea.vmem %s4, %s187
      %s189 = smul.u32 16, %s15
      %p190 = scmp.lt.s32.totalorder %s189, 63
      %s191 = scalar_select %p190, %s189, 63
      %s192 = smul.addr %s191, 4
      %s193 = scalar_lea.vmem %s0, %s192
      %s194 = smul.u32 16, %s15
      %s195 = smul.u32 16, %s15
      %p196 = scmp.lt.s32.totalorder %s195, 63
      %s197 = scalar_select %p196, %s195, 63
      %s198 = smul.addr %s197, 8
      %s199 = scalar_lea.vmem %s4, %s198
      %s200 = smul.u32 16, %s15
      %v202 = vld [vmem:[%s193] sm:$0xf]
      %v203 = vld [vmem:[%s193 + $0x4] sm:$0xf]
      %v204 = vld [vmem:[%s193 + $0x8] sm:$0xf]
      %v205 = vld [vmem:[%s193 + $0xc] sm:$0xf]
      %v206 = vld [vmem:[%s193 + $0x10] sm:$0xf]
      %v207 = vld [vmem:[%s193 + $0x14] sm:$0xf]
      %v208 = vld [vmem:[%s193 + $0x18] sm:$0xf]
      %v209 = vld [vmem:[%s193 + $0x1c] sm:$0xf]
      %v210 = vld [vmem:[%s193 + $0x20] sm:$0xf]
      %v211 = vld [vmem:[%s193 + $0x24] sm:$0xf]
      %v212 = vld [vmem:[%s193 + $0x28] sm:$0xf]
      %v213 = vld [vmem:[%s193 + $0x2c] sm:$0xf]
      %v214 = vld [vmem:[%s193 + $0x30] sm:$0xf]
      %v215 = vld [vmem:[%s193 + $0x34] sm:$0xf]
      %v216 = vld [vmem:[%s193 + $0x38] sm:$0xf]
      %v217 = vld [vmem:[%s193 + $0x3c] sm:$0xf]
      %v218 = vld [vmem:[%s1] sm:$0xf]
      %v219 = vld [vmem:[%s1 + $0x4] sm:$0xf]
      %v220 = vld [vmem:[%s1 + $0x8] sm:$0xf]
      %v221 = vld [vmem:[%s1 + $0xc] sm:$0xf]
      %v222 = vld [vmem:[%s1 + $0x10] sm:$0x3]
      %v239 = vunpack.c.l.b16 %v202
      %v240 = vunpack.c.l.b16 %v203
      %v241 = vunpack.c.l.b16 %v204
      %v242 = vunpack.c.l.b16 %v205
      %v243 = vunpack.c.l.b16 %v206
      %v244 = vunpack.c.l.b16 %v207
      %v245 = vunpack.c.l.b16 %v208
      %v246 = vunpack.c.l.b16 %v209
      %v247 = vunpack.c.l.b16 %v210
      %v248 = vunpack.c.l.b16 %v211
      %v249 = vunpack.c.l.b16 %v212
      %v250 = vunpack.c.l.b16 %v213
      %v251 = vunpack.c.l.b16 %v214
      %v252 = vunpack.c.l.b16 %v215
      %v253 = vunpack.c.l.b16 %v216
      %v254 = vunpack.c.l.b16 %v217
      %v255 = vpack.c.b16 %v240, %v239
      %v256 = vpack.c.b16 %v242, %v241
      %v257 = vpack.c.b16 %v244, %v243
      %v258 = vpack.c.b16 %v246, %v245
      %v259 = vpack.c.b16 %v248, %v247
      %v260 = vpack.c.b16 %v250, %v249
      %v261 = vpack.c.b16 %v252, %v251
      %v262 = vpack.c.b16 %v254, %v253
      %v268 = vunpack.c.l.b16 %v218
      %v269 = vunpack.c.l.b16 %v219
      %v270 = vunpack.c.l.b16 %v220
      %v271 = vunpack.c.l.b16 %v221
      %v272 = vunpack.c.l.b16 %v222
      %v273 = vpack.c.b16 %v269, %v268
      %v274 = vpack.c.b16 %v271, %v270
      %v275 = vpack.c.b16 %v272, %v272
      %vm278 = vcmask 293888
      %v280 = vsel %vm278, %v255, 0
      %v283 = vsel %vm278, %v256, 0
      %v286 = vsel %vm278, %v257, 0
      %v289 = vsel %vm278, %v258, 0
      %v292 = vsel %vm278, %v259, 0
      %v295 = vsel %vm278, %v260, 0
      %v298 = vsel %vm278, %v261, 0
      %v301 = vsel %vm278, %v262, 0
      %vm303 = vcmask 1041408
      %v305 = vsel %vm303, %v275, 0
      %307 = vmatprep.subr.bf16.mxu0 0
      %308 = vmatpush1.bf16.msra.mxu0 %v273
      %309 = vmatprep.subr.bf16.mxu0 0
      %310 = vmatpush1.bf16.msra.mxu0 %v274
      %311 = vmatprep.subr.bf16.mxu0 0
      %312 = vmatpush1.bf16.msra.mxu0 %v305
      %313 = vmatprep.subr.bf16.mxu0 0
      %314 = vmatpush1.bf16.msra.mxu0 0
      %315 = vmatprep.subr.bf16.mxu0 0
      %316 = vmatpush1.bf16.msra.mxu0 0
      %317 = vmatprep.subr.bf16.mxu0 0
      %318 = vmatpush1.bf16.msra.mxu0 0
      %319 = vmatprep.subr.bf16.mxu0 0
      %320 = vmatpush1.bf16.msra.mxu0 0
      %321 = vmatprep.subr.bf16.mxu0 0
      %322 = vmatpush1.bf16.msra.mxu0 0
      %323 = vmatprep.subr.bf16.mxu0 0
      %324 = vmatpush1.bf16.msra.mxu0 0
      %325 = vmatprep.subr.bf16.mxu0 0
      %326 = vmatpush1.bf16.msra.mxu0 0
      %327 = vmatprep.subr.bf16.mxu0 0
      %328 = vmatpush1.bf16.msra.mxu0 0
      %329 = vmatprep.subr.bf16.mxu0 0
      %330 = vmatpush1.bf16.msra.mxu0 0
      %331 = vmatprep.subr.bf16.mxu0 0
      %332 = vmatpush1.bf16.msra.mxu0 0
      %333 = vmatprep.subr.bf16.mxu0 0
      %334 = vmatpush1.bf16.msra.mxu0 0
      %335 = vmatprep.subr.bf16.mxu0 0
      %336 = vmatpush1.bf16.msra.mxu0 0
      %337 = vmatprep.subr.bf16.mxu0 0
      %338 = vmatpush1.bf16.msra.mxu0 0
      %339 = vmatprep.mubr.bf16.mxu0 0
      %340 = vmatmul.mubr.bf16.gmra.mrb[0].mxu0 %v280
      %v341 = vpop.f32.mrb[0].mxu0
      %v342 = vadd.f32 0.0, %v341
      %v343 = vpop.f32.mrb[0].mxu0
      %v344 = vpop.f32.mrb[0].mxu0
      %v345 = vadd.f32 0.0, %v344
      %v346 = vpop.f32.mrb[0].mxu0
      %347 = vmatprep.mubr.bf16.mxu0 0
      %348 = vmatmul.mubr.bf16.gmra.mrb[0].mxu0 %v283
      %v349 = vpop.f32.mrb[0].mxu0
      %v350 = vadd.f32 0.0, %v349
      %v351 = vpop.f32.mrb[0].mxu0
      %v352 = vpop.f32.mrb[0].mxu0
      %v353 = vadd.f32 0.0, %v352
      %v354 = vpop.f32.mrb[0].mxu0
      %355 = vmatprep.mubr.bf16.mxu0 0
      %356 = vmatmul.mubr.bf16.gmra.mrb[0].mxu0 %v286
      %v357 = vpop.f32.mrb[0].mxu0
      %v358 = vadd.f32 0.0, %v357
      %v359 = vpop.f32.mrb[0].mxu0
      %v360 = vpop.f32.mrb[0].mxu0
      %v361 = vadd.f32 0.0, %v360
      %v362 = vpop.f32.mrb[0].mxu0
      %363 = vmatprep.mubr.bf16.mxu0 0
      %364 = vmatmul.mubr.bf16.gmra.mrb[0].mxu0 %v289
      %v365 = vpop.f32.mrb[0].mxu0
      %v366 = vadd.f32 0.0, %v365
      %v367 = vpop.f32.mrb[0].mxu0
      %v368 = vpop.f32.mrb[0].mxu0
      %v369 = vadd.f32 0.0, %v368
      %v370 = vpop.f32.mrb[0].mxu0
      %371 = vmatprep.mubr.bf16.mxu0 0
      %372 = vmatmul.mubr.bf16.gmra.mrb[0].mxu0 %v292
      %v373 = vpop.f32.mrb[0].mxu0
      %v374 = vadd.f32 0.0, %v373
      %v375 = vpop.f32.mrb[0].mxu0
      %v376 = vpop.f32.mrb[0].mxu0
      %v377 = vadd.f32 0.0, %v376
      %v378 = vpop.f32.mrb[0].mxu0
      %379 = vmatprep.mubr.bf16.mxu0 0
      %380 = vmatmul.mubr.bf16.gmra.mrb[0].mxu0 %v295
      %v381 = vpop.f32.mrb[0].mxu0
      %v382 = vadd.f32 0.0, %v381
      %v383 = vpop.f32.mrb[0].mxu0
      %v384 = vpop.f32.mrb[0].mxu0
      %v385 = vadd.f32 0.0, %v384
      %v386 = vpop.f32.mrb[0].mxu0
      %387 = vmatprep.mubr.bf16.mxu0 0
      %388 = vmatmul.mubr.bf16.gmra.mrb[0].mxu0 %v298
      %v389 = vpop.f32.mrb[0].mxu0
      %v390 = vadd.f32 0.0, %v389
      %v391 = vpop.f32.mrb[0].mxu0
      %v392 = vpop.f32.mrb[0].mxu0
      %v393 = vadd.f32 0.0, %v392
      %v394 = vpop.f32.mrb[0].mxu0
      %395 = vmatprep.mubr.bf16.mxu0 0
      %396 = vmatmul.mubr.bf16.gmra.mrb[0].mxu0 %v301
      %v397 = vpop.f32.mrb[0].mxu0
      %v398 = vadd.f32 0.0, %v397
      %v399 = vpop.f32.mrb[0].mxu0
      %v400 = vpop.f32.mrb[0].mxu0
      %v401 = vadd.f32 0.0, %v400
      %v402 = vpop.f32.mrb[0].mxu0
      %403 = vdwg.mxu0
      %v404 = vld [vmem:[%s2] sm:$0x1]
      %v406 = vlaneseq
      %v407 = vshrl.u32 %v406, 7
      %v408 = vsub.s32 0, %v407
      %v409 = vrot.slane %v404, %v408
      %v411 = vmul.f32 %v342, %v409
      %v412 = vmul.f32 %v345, %v409
      %v413 = vmul.f32 %v350, %v409
      %v414 = vmul.f32 %v353, %v409
      %v415 = vmul.f32 %v358, %v409
      %v416 = vmul.f32 %v361, %v409
      %v417 = vmul.f32 %v366, %v409
      %v418 = vmul.f32 %v369, %v409
      %v419 = vmul.f32 %v374, %v409
      %v420 = vmul.f32 %v377, %v409
      %v421 = vmul.f32 %v382, %v409
      %v422 = vmul.f32 %v385, %v409
      %v423 = vmul.f32 %v390, %v409
      %v424 = vmul.f32 %v393, %v409
      %v425 = vmul.f32 %v398, %v409
      %v426 = vmul.f32 %v401, %v409
      %v427 = vld [vmem:[%s3] sm:$0x1]
      %v429 = vlaneseq
      %v430 = vshrl.u32 %v429, 7
      %v431 = vsub.s32 0, %v430
      %v432 = vrot.slane %v427, %v431
      %v434 = vadd.f32 %v411, %v432
      %v435 = vadd.f32 %v412, %v432
      %v436 = vadd.f32 %v413, %v432
      %v437 = vadd.f32 %v414, %v432
      %v438 = vadd.f32 %v415, %v432
      %v439 = vadd.f32 %v416, %v432
      %v440 = vadd.f32 %v417, %v432
      %v441 = vadd.f32 %v418, %v432
      %v442 = vadd.f32 %v419, %v432
      %v443 = vadd.f32 %v420, %v432
      %v444 = vadd.f32 %v421, %v432
      %v445 = vadd.f32 %v422, %v432
      %v446 = vadd.f32 %v423, %v432
      %v447 = vadd.f32 %v424, %v432
      %v448 = vadd.f32 %v425, %v432
      %v449 = vadd.f32 %v426, %v432
      %v450 = vmax.f32 %v434, 0.0
      %v451 = vmax.f32 %v435, 0.0
      %v452 = vmax.f32 %v436, 0.0
      %v453 = vmax.f32 %v437, 0.0
      %v454 = vmax.f32 %v438, 0.0
      %v455 = vmax.f32 %v439, 0.0
      %v456 = vmax.f32 %v440, 0.0
      %v457 = vmax.f32 %v441, 0.0
      %v458 = vmax.f32 %v442, 0.0
      %v459 = vmax.f32 %v443, 0.0
      %v460 = vmax.f32 %v444, 0.0
      %v461 = vmax.f32 %v445, 0.0
      %v462 = vmax.f32 %v446, 0.0
      %v463 = vmax.f32 %v447, 0.0
      %v464 = vmax.f32 %v448, 0.0
      %v465 = vmax.f32 %v449, 0.0
      %466 = vst [vmem:[%s199] sm:$0xff] %v450
      %467 = vst [vmem:[%s199 + $0x8] sm:$0xff] %v451
      %468 = vst [vmem:[%s199 + $0x10] sm:$0xff] %v452
      %469 = vst [vmem:[%s199 + $0x18] sm:$0xff] %v453
      %470 = vst [vmem:[%s199 + $0x20] sm:$0xff] %v454
      %471 = vst [vmem:[%s199 + $0x28] sm:$0xff] %v455
      %472 = vst [vmem:[%s199 + $0x30] sm:$0xff] %v456
      %473 = vst [vmem:[%s199 + $0x38] sm:$0xff] %v457
      %474 = vst [vmem:[%s199 + $0x40] sm:$0xff] %v458
      %475 = vst [vmem:[%s199 + $0x48] sm:$0xff] %v459
      %476 = vst [vmem:[%s199 + $0x50] sm:$0xff] %v460
      %477 = vst [vmem:[%s199 + $0x58] sm:$0xff] %v461
      %478 = vst [vmem:[%s199 + $0x60] sm:$0xff] %v462
      %479 = vst [vmem:[%s199 + $0x68] sm:$0xff] %v463
      %480 = vst [vmem:[%s199 + $0x70] sm:$0xff] %v464
      %481 = vst [vmem:[%s199 + $0x78] sm:$0xff] %v465
      %s482 = smul.u32 16, %s15
      %p483 = scmp.lt.s32.totalorder %s482, 63
      %s484 = scalar_select %p483, %s482, 63
      %s485 = smul.addr %s484, 8
      %s486 = scalar_lea.vmem %s4, %s485
      // Predicated region
      $region37: #{conv_block_forward.3} parent=35 // pred_check
        %p487 = pneg %p122
      $region38: #{conv_block_forward.3} parent=35 // pred_check_branch
        %489 = sbr.rel (%p487) target = $region40
      $region39: #{conv_block_forward.3} parent=35 // pred_region
        %s490 = smul.u32 16, %s15
      $region40: #{conv_block_forward.3} parent=35 // pred_fallthru
        _
    $region36: #{conv_block_forward.3} parent=5 // pred_fallthru
      _
    %p491 = scmp.le.s32.totalorder 2, %s10
    // Predicated region
    $region41: #{conv_block_forward.3} parent=5 // pred_check
      %p492 = pneg %p491
    $region42: #{conv_block_forward.3} parent=5 // pred_check_branch
      %494 = sbr.rel (%p492) target = $region44
    $region43: #{conv_block_forward.3} parent=5 // pred_region
      %s495 = ssub.s32 %s10, 2
      // Predicated region
      $region45: #{conv_block_forward.3} parent=43 // pred_check
        %p496 = pneg %p128
      $region46: #{conv_block_forward.3} parent=43 // pred_check_branch
        %498 = sbr.rel (%p496) target = $region48
      $region47: #{conv_block_forward.3} parent=43 // pred_region
        %s499 = smul.u32 16, %s16
        %p500 = scmp.lt.s32.totalorder %s499, 63
        %s501 = scalar_select %p500, %s499, 63
        %s502 = smul.addr %s501, 8
        %s503 = scalar_lea.vmem %s4, %s502
      $region48: #{conv_block_forward.3} parent=43 // pred_fallthru
        _
    $region44: #{conv_block_forward.3} parent=5 // pred_fallthru
      _
  $region6: #{conv_block_forward.3} parent=0 // loop_footer
    %s14 = sadd.s32 1, %s10
  $region7: #{conv_block_forward.3} parent=0 // loop_footer_branch
    %9 = sbr.rel target = $region3
  $region8: #{conv_block_forward.3} parent=0 // loop_exit
    _

// kernel: conv_block_forward.2
$region0: #{conv_block_forward.2}
  #allocation0 [shape = 'u32[]', space=smem, size = 0x4, offset = 0x4, fixed_abs, tag = 'smem constant byte address 0x4 - core index']
  #allocation1 [shape = 'u32[144,128]{1,0:T(1,128)}', space=vmem, size = 0x12000, scoped, tag = 'internal scratch']
  %s0 = inlined_call_operand.vmem [shape: bf16[512,36], index: 0, kind: input, shape index: {}]
  %s1 = inlined_call_operand.vmem [shape: bf16[36,128], index: 1, kind: input, shape index: {}]
  %s2 = inlined_call_operand.vmem [shape: f32[4,8,128], index: 2, kind: output, shape index: {0}]
  %s3 = inlined_call_operand.vmem [shape: f32[4,8,128], index: 3, kind: output, shape index: {1}]
  %4 = xla_tuple %s2, %s3
  %s5 = sld [smem:[#allocation0]]
  $region49: #{conv_block_forward.2} parent=0
    _
  %s7 = ssub.s32 1, %s5
  %s8 = scalar_select 0, %s7, %s5
  loop: start=0, step=1, limit=6
  $region2: #{conv_block_forward.2} parent=0 // loop_pre_header
    _
  $region3: #{conv_block_forward.2} parent=0 // loop_header
    %s10 = sphi 0, %s14
    %p11 = scmp.ge.s32.totalorder %s10, 6
    %s20 = sphi 0, %s22
    %s23 = sphi 0, %s20
    %s24 = sphi 0, %s23
    %s40 = sphi 0, %s24
    %s44 = sphi 0, %s44
    %s46 = sphi 0, %s44
    %s47 = sphi 0, %s46
    %s61 = sphi 0, %s47
    %s67 = sphi 0, %s69
    %s70 = sphi 0, %s67
    %s71 = sphi 0, %s70
    %s87 = sphi 0, %s71
    %s93 = sphi 0, %s95
    %s96 = sphi 0, %s93
    %s97 = sphi 0, %s96
    %s113 = sphi 0, %s97
  $region4: #{conv_block_forward.2} parent=0 // loop_header_branch
    %13 = sbr.rel (%p11) target = $region8
  $region5: #{conv_block_forward.2} parent=0 // loop_body
    %s15 = ssub.s32 %s10, 1
    %s16 = ssub.s32 %s10, 2
    %s17 = sadd.s32 %s10, 1
    %s18 = ssub.s32 %s10, %s17
    %p19 = scmp.eq.s32.totalorder %s18, 0
    %s21 = sadd.s32 %s20, 1
    %s22 = scalar_select %p19, %s20, %s21
    %p25 = pneg %p19
    %p26 = scmp.eq.s32.totalorder %s10, 3
    %p27 = por %p25, %p26
    %p28 = scmp.ne.s32.totalorder %s20, %s23
    %p29 = scmp.eq.s32.totalorder %s10, 0
    %p30 = por %p28, %p29
    %p31 = scmp.ne.s32.totalorder %s20, %s23
    %p32 = scmp.eq.s32.totalorder %s15, 3
    %p33 = por %p31, %p32
    %p34 = scmp.ne.s32.totalorder %s23, %s24
    %p35 = scmp.eq.s32.totalorder %s15, 0
    %p36 = por %p34, %p35
    %p37 = scmp.ne.s32.totalorder %s23, %s24
    %p38 = scmp.eq.s32.totalorder %s16, 3
    %p39 = por %p37, %p38
    %p41 = scmp.ne.s32.totalorder %s24, %s40
    %p42 = scmp.eq.s32.totalorder %s16, 0
    %p43 = por %p41, %p42
    %s45 = sadd.s32 %s44, 1
    %p48 = scmp.eq.s32.totalorder %s10, 3
    %p49 = scmp.ne.s32.totalorder %s44, %s46
    %p50 = scmp.eq.s32.totalorder %s10, 0
    %p51 = por %p49, %p50
    %p52 = scmp.ne.s32.totalorder %s44, %s46
    %p53 = scmp.eq.s32.totalorder %s15, 3
    %p54 = por %p52, %p53
    %p55 = scmp.ne.s32.totalorder %s46, %s47
    %p56 = scmp.eq.s32.totalorder %s15, 0
    %p57 = por %p55, %p56
    %p58 = scmp.ne.s32.totalorder %s46, %s47
    %p59 = scmp.eq.s32.totalorder %s16, 3
    %p60 = por %p58, %p59
    %p62 = scmp.ne.s32.totalorder %s47, %s61
    %p63 = scmp.eq.s32.totalorder %s16, 0
    %p64 = por %p62, %p63
    %s65 = ssub.s32 %s10, %s17
    %p66 = scmp.eq.s32.totalorder %s65, 0
    %s68 = sadd.s32 %s67, 1
    %s69 = scalar_select %p66, %s67, %s68
    %p72 = pneg %p66
    %p73 = scmp.eq.s32.totalorder %s10, 3
    %p74 = por %p72, %p73
    %p75 = scmp.ne.s32.totalorder %s67, %s70
    %p76 = scmp.eq.s32.totalorder %s10, 0
    %p77 = por %p75, %p76
    %p78 = scmp.ne.s32.totalorder %s67, %s70
    %p79 = scmp.eq.s32.totalorder %s15, 3
    %p80 = por %p78, %p79
    %p81 = scmp.ne.s32.totalorder %s70, %s71
    %p82 = scmp.eq.s32.totalorder %s15, 0
    %p83 = por %p81, %p82
    %p84 = scmp.ne.s32.totalorder %s70, %s71
    %p85 = scmp.eq.s32.totalorder %s16, 3
    %p86 = por %p84, %p85
    %p88 = scmp.ne.s32.totalorder %s71, %s87
    %p89 = scmp.eq.s32.totalorder %s16, 0
    %p90 = por %p88, %p89
    %s91 = ssub.s32 %s10, %s17
    %p92 = scmp.eq.s32.totalorder %s91, 0
    %s94 = sadd.s32 %s93, 1
    %s95 = scalar_select %p92, %s93, %s94
    %p98 = pneg %p92
    %p99 = scmp.eq.s32.totalorder %s10, 3
    %p100 = por %p98, %p99
    %p101 = scmp.ne.s32.totalorder %s93, %s96
    %p102 = scmp.eq.s32.totalorder %s10, 0
    %p103 = por %p101, %p102
    %p104 = scmp.ne.s32.totalorder %s93, %s96
    %p105 = scmp.eq.s32.totalorder %s15, 3
    %p106 = por %p104, %p105
    %p107 = scmp.ne.s32.totalorder %s96, %s97
    %p108 = scmp.eq.s32.totalorder %s15, 0
    %p109 = por %p107, %p108
    %p110 = scmp.ne.s32.totalorder %s96, %s97
    %p111 = scmp.eq.s32.totalorder %s16, 3
    %p112 = por %p110, %p111
    %p114 = scmp.ne.s32.totalorder %s97, %s113
    %p115 = scmp.eq.s32.totalorder %s16, 0
    %p116 = por %p114, %p115
    %p117 = scmp.le.s32.totalorder 1, %s10
    %p118 = scmp.lt.s32.totalorder %s10, 5
    %p119 = pnand %p117, %p118
    %p120 = pneg %p119
    // Predicated region
    $region9: #{conv_block_forward.2} parent=5 // pred_check
      _
    $region10: #{conv_block_forward.2} parent=5 // pred_check_branch
      %122 = sbr.rel (%p119) target = $region12
    $region11: #{conv_block_forward.2} parent=5 // pred_region
      %s123 = ssub.s32 %s10, 1
      // Predicated region
      $region13: #{conv_block_forward.2} parent=11 // pred_check
        %p124 = pneg %p57
      $region14: #{conv_block_forward.2} parent=11 // pred_check_branch
        %126 = sbr.rel (%p124) target = $region16
      $region15: #{conv_block_forward.2} parent=11 // pred_region
        _
      $region16: #{conv_block_forward.2} parent=11 // pred_fallthru
        _
    $region12: #{conv_block_forward.2} parent=5 // pred_fallthru
      _
    %p127 = scmp.lt.s32.totalorder %s10, 4
    // Predicated region
    $region17: #{conv_block_forward.2} parent=5 // pred_check
      %p128 = pneg %p127
    $region18: #{conv_block_forward.2} parent=5 // pred_check_branch
      %130 = sbr.rel (%p128) target = $region20
    $region19: #{conv_block_forward.2} parent=5 // pred_region
      // Predicated region
      $region21: #{conv_block_forward.2} parent=19 // pred_check
        %p131 = pneg %p30
      $region22: #{conv_block_forward.2} parent=19 // pred_check_branch
        %133 = sbr.rel (%p131) target = $region24
      $region23: #{conv_block_forward.2} parent=19 // pred_region
        %s134 = smul.u32 16, %s10
        %p135 = scmp.lt.s32.totalorder %s134, 63
        %s136 = scalar_select %p135, %s134, 63
        %s137 = smul.addr %s136, 4
        %s138 = scalar_lea.vmem %s0, %s137
        %s139 = smul.u32 16, %s10
      $region24: #{conv_block_forward.2} parent=19 // pred_fallthru
        _
    $region20: #{conv_block_forward.2} parent=5 // pred_fallthru
      _
    %p140 = scmp.le.s32.totalorder 1, %s10
    %p141 = scmp.lt.s32.totalorder %s10, 5
    %p142 = pnand %p140, %p141
    %p143 = pneg %p142
    // Predicated region
    $region25: #{conv_block_forward.2} parent=5 // pred_check
      _
    $region26: #{conv_block_forward.2} parent=5 // pred_check_branch
      %145 = sbr.rel (%p142) target = $region28
    $region27: #{conv_block_forward.2} parent=5 // pred_region
      %s146 = ssub.s32 %s10, 1
      %s147 = smul.u32 16, %s15
      %p148 = scmp.lt.s32.totalorder %s147, 63
      %s149 = scalar_select %p148, %s147, 63
      %s150 = smul.addr %s149, 4
      %s151 = scalar_lea.vmem %s0, %s150
      %p152 = pneg %p36
      %p153 = pneg %p33
      %p154 = pneg %p57
      %p155 = pneg %p54
      %p156 = pneg %p83
      %p157 = pneg %p80
      %p158 = scmp.lt.s32.totalorder %s15, 3
      %s159 = scalar_select %p158, %s15, 3
      %s160 = smul.addr %s159, 8
      %s161 = scalar_lea.vmem %s2, %s160
      %p162 = pneg %p109
      %p163 = pneg %p106
      %p164 = scmp.lt.s32.totalorder %s15, 3
      %s165 = scalar_select %p164, %s15, 3
      %s166 = smul.addr %s165, 8
      %s167 = scalar_lea.vmem %s3, %s166
      %s168 = smul.u32 16, %s15
      %p169 = scmp.lt.s32.totalorder %s168, 63
      %s170 = scalar_select %p169, %s168, 63
      %s171 = smul.addr %s170, 4
      %s172 = scalar_lea.vmem %s0, %s171
      %s173 = smul.u32 16, %s15
      %p174 = scmp.lt.s32.totalorder %s15, 3
      %s175 = scalar_select %p174, %s15, 3
      %s176 = smul.addr %s175, 8
      %s177 = scalar_lea.vmem %s2, %s176
      %p178 = scmp.lt.s32.totalorder %s15, 3
      %s179 = scalar_select %p178, %s15, 3
      %s180 = smul.addr %s179, 8
      %s181 = scalar_lea.vmem %s3, %s180
      %v183 = vld [vmem:[%s172] sm:$0xf]
      %v184 = vld [vmem:[%s172 + $0x4] sm:$0xf]
      %v185 = vld [vmem:[%s172 + $0x8] sm:$0xf]
      %v186 = vld [vmem:[%s172 + $0xc] sm:$0xf]
      %v187 = vld [vmem:[%s172 + $0x10] sm:$0xf]
      %v188 = vld [vmem:[%s172 + $0x14] sm:$0xf]
      %v189 = vld [vmem:[%s172 + $0x18] sm:$0xf]
      %v190 = vld [vmem:[%s172 + $0x1c] sm:$0xf]
      %v191 = vld [vmem:[%s172 + $0x20] sm:$0xf]
      %v192 = vld [vmem:[%s172 + $0x24] sm:$0xf]
      %v193 = vld [vmem:[%s172 + $0x28] sm:$0xf]
      %v194 = vld [vmem:[%s172 + $0x2c] sm:$0xf]
      %v195 = vld [vmem:[%s172 + $0x30] sm:$0xf]
      %v196 = vld [vmem:[%s172 + $0x34] sm:$0xf]
      %v197 = vld [vmem:[%s172 + $0x38] sm:$0xf]
      %v198 = vld [vmem:[%s172 + $0x3c] sm:$0xf]
      %v199 = vld [vmem:[%s1] sm:$0xf]
      %v200 = vld [vmem:[%s1 + $0x4] sm:$0xf]
      %v201 = vld [vmem:[%s1 + $0x8] sm:$0xf]
      %v202 = vld [vmem:[%s1 + $0xc] sm:$0xf]
      %v203 = vld [vmem:[%s1 + $0x10] sm:$0x3]
      %v220 = vunpack.c.l.b16 %v183
      %v221 = vunpack.c.l.b16 %v184
      %v222 = vunpack.c.l.b16 %v185
      %v223 = vunpack.c.l.b16 %v186
      %v224 = vunpack.c.l.b16 %v187
      %v225 = vunpack.c.l.b16 %v188
      %v226 = vunpack.c.l.b16 %v189
      %v227 = vunpack.c.l.b16 %v190
      %v228 = vunpack.c.l.b16 %v191
      %v229 = vunpack.c.l.b16 %v192
      %v230 = vunpack.c.l.b16 %v193
      %v231 = vunpack.c.l.b16 %v194
      %v232 = vunpack.c.l.b16 %v195
      %v233 = vunpack.c.l.b16 %v196
      %v234 = vunpack.c.l.b16 %v197
      %v235 = vunpack.c.l.b16 %v198
      %v236 = vpack.c.b16 %v221, %v220
      %v237 = vpack.c.b16 %v223, %v222
      %v238 = vpack.c.b16 %v225, %v224
      %v239 = vpack.c.b16 %v227, %v226
      %v240 = vpack.c.b16 %v229, %v228
      %v241 = vpack.c.b16 %v231, %v230
      %v242 = vpack.c.b16 %v233, %v232
      %v243 = vpack.c.b16 %v235, %v234
      %v249 = vunpack.c.l.b16 %v199
      %v250 = vunpack.c.l.b16 %v200
      %v251 = vunpack.c.l.b16 %v201
      %v252 = vunpack.c.l.b16 %v202
      %v253 = vunpack.c.l.b16 %v203
      %v254 = vpack.c.b16 %v250, %v249
      %v255 = vpack.c.b16 %v252, %v251
      %v256 = vpack.c.b16 %v253, %v253
      %vm259 = vcmask 293888
      %v261 = vsel %vm259, %v236, 0
      %v264 = vsel %vm259, %v237, 0
      %v267 = vsel %vm259, %v238, 0
      %v270 = vsel %vm259, %v239, 0
      %v273 = vsel %vm259, %v240, 0
      %v276 = vsel %vm259, %v241, 0
      %v279 = vsel %vm259, %v242, 0
      %v282 = vsel %vm259, %v243, 0
      %vm284 = vcmask 1041408
      %v286 = vsel %vm284, %v256, 0
      %288 = vmatprep.subr.bf16.mxu0 0
      %289 = vmatpush1.bf16.msra.mxu0 %v254
      %290 = vmatprep.subr.bf16.mxu0 0
      %291 = vmatpush1.bf16.msra.mxu0 %v255
      %292 = vmatprep.subr.bf16.mxu0 0
      %293 = vmatpush1.bf16.msra.mxu0 %v286
      %294 = vmatprep.subr.bf16.mxu0 0
      %295 = vmatpush1.bf16.msra.mxu0 0
      %296 = vmatprep.subr.bf16.mxu0 0
      %297 = vmatpush1.bf16.msra.mxu0 0
      %298 = vmatprep.subr.bf16.mxu0 0
      %299 = vmatpush1.bf16.msra.mxu0 0
      %300 = vmatprep.subr.bf16.mxu0 0
      %301 = vmatpush1.bf16.msra.mxu0 0
      %302 = vmatprep.subr.bf16.mxu0 0
      %303 = vmatpush1.bf16.msra.mxu0 0
      %304 = vmatprep.subr.bf16.mxu0 0
      %305 = vmatpush1.bf16.msra.mxu0 0
      %306 = vmatprep.subr.bf16.mxu0 0
      %307 = vmatpush1.bf16.msra.mxu0 0
      %308 = vmatprep.subr.bf16.mxu0 0
      %309 = vmatpush1.bf16.msra.mxu0 0
      %310 = vmatprep.subr.bf16.mxu0 0
      %311 = vmatpush1.bf16.msra.mxu0 0
      %312 = vmatprep.subr.bf16.mxu0 0
      %313 = vmatpush1.bf16.msra.mxu0 0
      %314 = vmatprep.subr.bf16.mxu0 0
      %315 = vmatpush1.bf16.msra.mxu0 0
      %316 = vmatprep.subr.bf16.mxu0 0
      %317 = vmatpush1.bf16.msra.mxu0 0
      %318 = vmatprep.subr.bf16.mxu0 0
      %319 = vmatpush1.bf16.msra.mxu0 0
      %320 = vmatprep.mubr.bf16.mxu0 0
      %321 = vmatmul.mubr.bf16.gmra.mrb[0].mxu0 %v261
      %v322 = vpop.f32.mrb[0].mxu0
      %v323 = vadd.f32 0.0, %v322
      %v324 = vpop.f32.mrb[0].mxu0
      %v325 = vpop.f32.mrb[0].mxu0
      %v326 = vadd.f32 0.0, %v325
      %v327 = vpop.f32.mrb[0].mxu0
      %328 = vmatprep.mubr.bf16.mxu0 0
      %329 = vmatmul.mubr.bf16.gmra.mrb[0].mxu0 %v264
      %v330 = vpop.f32.mrb[0].mxu0
      %v331 = vadd.f32 0.0, %v330
      %v332 = vpop.f32.mrb[0].mxu0
      %v333 = vpop.f32.mrb[0].mxu0
      %v334 = vadd.f32 0.0, %v333
      %v335 = vpop.f32.mrb[0].mxu0
      %336 = vmatprep.mubr.bf16.mxu0 0
      %337 = vmatmul.mubr.bf16.gmra.mrb[0].mxu0 %v267
      %v338 = vpop.f32.mrb[0].mxu0
      %v339 = vadd.f32 0.0, %v338
      %v340 = vpop.f32.mrb[0].mxu0
      %v341 = vpop.f32.mrb[0].mxu0
      %v342 = vadd.f32 0.0, %v341
      %v343 = vpop.f32.mrb[0].mxu0
      %344 = vmatprep.mubr.bf16.mxu0 0
      %345 = vmatmul.mubr.bf16.gmra.mrb[0].mxu0 %v270
      %v346 = vpop.f32.mrb[0].mxu0
      %v347 = vadd.f32 0.0, %v346
      %v348 = vpop.f32.mrb[0].mxu0
      %v349 = vpop.f32.mrb[0].mxu0
      %v350 = vadd.f32 0.0, %v349
      %v351 = vpop.f32.mrb[0].mxu0
      %352 = vmatprep.mubr.bf16.mxu0 0
      %353 = vmatmul.mubr.bf16.gmra.mrb[0].mxu0 %v273
      %v354 = vpop.f32.mrb[0].mxu0
      %v355 = vadd.f32 0.0, %v354
      %v356 = vpop.f32.mrb[0].mxu0
      %v357 = vpop.f32.mrb[0].mxu0
      %v358 = vadd.f32 0.0, %v357
      %v359 = vpop.f32.mrb[0].mxu0
      %360 = vmatprep.mubr.bf16.mxu0 0
      %361 = vmatmul.mubr.bf16.gmra.mrb[0].mxu0 %v276
      %v362 = vpop.f32.mrb[0].mxu0
      %v363 = vadd.f32 0.0, %v362
      %v364 = vpop.f32.mrb[0].mxu0
      %v365 = vpop.f32.mrb[0].mxu0
      %v366 = vadd.f32 0.0, %v365
      %v367 = vpop.f32.mrb[0].mxu0
      %368 = vmatprep.mubr.bf16.mxu0 0
      %369 = vmatmul.mubr.bf16.gmra.mrb[0].mxu0 %v279
      %v370 = vpop.f32.mrb[0].mxu0
      %v371 = vadd.f32 0.0, %v370
      %v372 = vpop.f32.mrb[0].mxu0
      %v373 = vpop.f32.mrb[0].mxu0
      %v374 = vadd.f32 0.0, %v373
      %v375 = vpop.f32.mrb[0].mxu0
      %376 = vmatprep.mubr.bf16.mxu0 0
      %377 = vmatmul.mubr.bf16.gmra.mrb[0].mxu0 %v282
      %v378 = vpop.f32.mrb[0].mxu0
      %v379 = vadd.f32 0.0, %v378
      %v380 = vpop.f32.mrb[0].mxu0
      %v381 = vpop.f32.mrb[0].mxu0
      %v382 = vadd.f32 0.0, %v381
      %v383 = vpop.f32.mrb[0].mxu0
      %384 = vdwg.mxu0
      %v385 = vadd.f32 %v323, %v326
      %v386 = vadd.f32 %v385, %v331
      %v387 = vadd.f32 %v386, %v334
      %v388 = vadd.f32 %v387, %v339
      %v389 = vadd.f32 %v388, %v342
      %v390 = vadd.f32 %v389, %v347
      %v391 = vadd.f32 %v390, %v350
      %v392 = vadd.f32 %v391, %v355
      %v393 = vadd.f32 %v392, %v358
      %v394 = vadd.f32 %v393, %v363
      %v395 = vadd.f32 %v394, %v366
      %v396 = vadd.f32 %v395, %v371
      %v397 = vadd.f32 %v396, %v374
      %v398 = vadd.f32 %v397, %v379
      %v399 = vadd.f32 %v398, %v382
      %400 = vst [vmem:[%s177] sm:$0xff] %v399
      %v401 = vmul.f32 %v323, %v323
      %v402 = vmul.f32 %v326, %v326
      %v403 = vmul.f32 %v331, %v331
      %v404 = vmul.f32 %v334, %v334
      %v405 = vmul.f32 %v339, %v339
      %v406 = vmul.f32 %v342, %v342
      %v407 = vmul.f32 %v347, %v347
      %v408 = vmul.f32 %v350, %v350
      %v409 = vmul.f32 %v355, %v355
      %v410 = vmul.f32 %v358, %v358
      %v411 = vmul.f32 %v363, %v363
      %v412 = vmul.f32 %v366, %v366
      %v413 = vmul.f32 %v371, %v371
      %v414 = vmul.f32 %v374, %v374
      %v415 = vmul.f32 %v379, %v379
      %v416 = vmul.f32 %v382, %v382
      %v417 = vadd.f32 %v401, %v402
      %v418 = vadd.f32 %v417, %v403
      %v419 = vadd.f32 %v418, %v404
      %v420 = vadd.f32 %v419, %v405
      %v421 = vadd.f32 %v420, %v406
      %v422 = vadd.f32 %v421, %v407
      %v423 = vadd.f32 %v422, %v408
      %v424 = vadd.f32 %v423, %v409
      %v425 = vadd.f32 %v424, %v410
      %v426 = vadd.f32 %v425, %v411
      %v427 = vadd.f32 %v426, %v412
      %v428 = vadd.f32 %v427, %v413
      %v429 = vadd.f32 %v428, %v414
      %v430 = vadd.f32 %v429, %v415
      %v431 = vadd.f32 %v430, %v416
      %432 = vst [vmem:[%s181] sm:$0xff] %v431
      %p433 = scmp.lt.s32.totalorder %s15, 3
      %s434 = scalar_select %p433, %s15, 3
      %s435 = smul.addr %s434, 8
      %s436 = scalar_lea.vmem %s2, %s435
      %p437 = scmp.lt.s32.totalorder %s15, 3
      %s438 = scalar_select %p437, %s15, 3
      %s439 = smul.addr %s438, 8
      %s440 = scalar_lea.vmem %s3, %s439
      // Predicated region
      $region29: #{conv_block_forward.2} parent=27 // pred_check
        %p441 = pneg %p80
      $region30: #{conv_block_forward.2} parent=27 // pred_check_branch
        %443 = sbr.rel (%p441) target = $region32
      $region31: #{conv_block_forward.2} parent=27 // pred_region
        _
      $region32: #{conv_block_forward.2} parent=27 // pred_fallthru
        _
      // Predicated region
      $region33: #{conv_block_forward.2} parent=27 // pred_check
        %p444 = pneg %p106
      $region34: #{conv_block_forward.2} parent=27 // pred_check_branch
        %446 = sbr.rel (%p444) target = $region36
      $region35: #{conv_block_forward.2} parent=27 // pred_region
        _
      $region36: #{conv_block_forward.2} parent=27 // pred_fallthru
        _
    $region28: #{conv_block_forward.2} parent=5 // pred_fallthru
      _
    %p447 = scmp.le.s32.totalorder 2, %s10
    // Predicated region
    $region37: #{conv_block_forward.2} parent=5 // pred_check
      %p448 = pneg %p447
    $region38: #{conv_block_forward.2} parent=5 // pred_check_branch
      %450 = sbr.rel (%p448) target = $region40
    $region39: #{conv_block_forward.2} parent=5 // pred_region
      %s451 = ssub.s32 %s10, 2
      // Predicated region
      $region41: #{conv_block_forward.2} parent=39 // pred_check
        %p452 = pneg %p86
      $region42: #{conv_block_forward.2} parent=39 // pred_check_branch
        %454 = sbr.rel (%p452) target = $region44
      $region43: #{conv_block_forward.2} parent=39 // pred_region
        %p455 = scmp.lt.s32.totalorder %s16, 3
        %s456 = scalar_select %p455, %s16, 3
        %s457 = smul.addr %s456, 8
        %s458 = scalar_lea.vmem %s2, %s457
      $region44: #{conv_block_forward.2} parent=39 // pred_fallthru
        _
      // Predicated region
      $region45: #{conv_block_forward.2} parent=39 // pred_check
        %p459 = pneg %p112
      $region46: #{conv_block_forward.2} parent=39 // pred_check_branch
        %461 = sbr.rel (%p459) target = $region48
      $region47: #{conv_block_forward.2} parent=39 // pred_region
        %p462 = scmp.lt.s32.totalorder %s16, 3
        %s463 = scalar_select %p462, %s16, 3
        %s464 = smul.addr %s463, 8
        %s465 = scalar_lea.vmem %s3, %s464
      $region48: #{conv_block_forward.2} parent=39 // pred_fallthru
        _
    $region40: #{conv_block_forward.2} parent=5 // pred_fallthru
      _
  $region6: #{conv_block_forward.2} parent=0 // loop_footer
    %s14 = sadd.s32 1, %s10
  $region7: #{conv_block_forward.2} parent=0 // loop_footer_branch
    %9 = sbr.rel target = $region3
  $region8: #{conv_block_forward.2} parent=0 // loop_exit
    _

</llo_original>
